<compile_context>
chip_gen: v7x
topology: tpu7x:2x2x1
jax: 0.10.0
libtpu: 0.0.40
codegen_flags: <defaults>
</compile_context>

<pallas_src>
import jax
import jax.numpy as jnp
from jax.experimental import pallas as pl
from jax.experimental.pallas import tpu as pltpu

INPUT_DIM = 16     # config['model']['input_dim']
HIDDEN_DIM = 32    # config['model']['hidden_dim']
OUTPUT_DIM = 16    # config['model']['output_dim']
GAT_HEADS = 1      # see NOTE above (required for shape-consistent forward)
MHA_HEADS = 4
N_NODES = 16
OUT_LANES = 128    # padded lane width of the single output slab


def _gnn_kernel(x_ref, graph_ref, w_in_ref, att_ref, w_big_ref, vec_ref, out_ref):
    N = x_ref.shape[0]
    H = HIDDEN_DIM
    O = OUTPUT_DIM

    x = x_ref[...]                                   # (N, D)
    g = graph_ref[...]                               # (N, 4N)
    adj_t = g[:, 0:N]
    ea_t = g[:, N:2 * N]                             # already scaled by e_coef_t
    adj_c = g[:, 2 * N:3 * N]
    ea_c = g[:, 3 * N:4 * N]                         # already scaled by e_coef_c

    wb = w_big_ref[...]                              # (H, 8H+O)
    vec = vec_ref[...]                               # (3, 128)

    # --- fused GAT input projections (both branches in one matmul) ---
    h_pack = jnp.dot(x, w_in_ref[...], preferred_element_type=jnp.float32)  # (N, 2H)
    h_t = h_pack[:, :H]
    h_c = h_pack[:, H:]

    # --- fused attention-vector logits: columns = [dst_t, src_t, dst_c, src_c] ---
    logits = jnp.dot(h_pack, att_ref[...], preferred_element_type=jnp.float32)  # (N, 4)
    logits_r = jnp.transpose(logits)                                             # (4, N)

    def gat_attn(adj, ea_scaled, al_dst, al_src_row):
        s = al_dst + al_src_row + ea_scaled           # (N_dst, N_src)
        s = jnp.where(s > 0, s, 0.2 * s)              # LeakyReLU(0.2)
        mask = adj > 0                                # computed once, reused
        s = jnp.where(mask, s, jnp.float32(-1e30))
        m = jnp.max(s, axis=-1, keepdims=True)
        p = jnp.where(mask, jnp.exp(s - m), 0.0)
        denom = jnp.maximum(jnp.sum(p, axis=-1, keepdims=True), 1e-16)
        return p / denom

    attn_t = gat_attn(adj_t, ea_t, logits[:, 0:1], logits_r[1:2, :])
    attn_c = gat_attn(adj_c, ea_c, logits[:, 2:3], logits_r[3:4, :])

    bias_t = vec[1:2, 0:H]
    bias_c = vec[1:2, H:2 * H]
    h_temporal = jnp.dot(attn_t, h_t, preferred_element_type=jnp.float32) + bias_t
    h_causal = jnp.dot(attn_c, h_c, preferred_element_type=jnp.float32) + bias_c
    # dropout -> eval-mode identity

    # --- temporal_encoder: LSTM over a length-1 sequence, zero (h0, c0) ---
    b_lstm = vec[0:1, 0:4 * H]
    gates = jnp.dot(h_temporal, wb[:, 0:4 * H],
                    preferred_element_type=jnp.float32) + b_lstm            # (N, 4H)
    i_g = jax.nn.sigmoid(gates[:, 0:H])
    g_g = jnp.tanh(gates[:, 2 * H:3 * H])
    o_g = jax.nn.sigmoid(gates[:, 3 * H:4 * H])
    c = i_g * g_g                        # f-gate * c0 vanishes (c0 = 0)
    h_temporal_final = o_g * jnp.tanh(c)

    # --- causal_attention: single-key MHA == out_proj(v_proj(h_causal)) ---
    bv = vec[1:2, 2 * H:3 * H]
    bo = vec[1:2, 3 * H:4 * H]
    v = jnp.dot(h_causal, wb[:, 4 * H:5 * H],
                preferred_element_type=jnp.float32) + bv
    h_causal_final = jnp.dot(v, wb[:, 5 * H:6 * H],
                             preferred_element_type=jnp.float32) + bo

    # --- fusion (wf split into two (H,H) blocks: no lane-concat) + output ---
    bf = vec[2:3, 0:H]
    bout = vec[2:3, H:H + O]
    fused = jnp.maximum(
        jnp.dot(h_temporal_final, wb[:, 6 * H:7 * H],
                preferred_element_type=jnp.float32)
        + jnp.dot(h_causal_final, wb[:, 7 * H:8 * H],
                  preferred_element_type=jnp.float32)
        + bf, 0.0)
    out = jnp.dot(fused, wb[:, 8 * H:8 * H + O],
                  preferred_element_type=jnp.float32) + bout

    # --- single lane-dense output slab: [out | h_temporal | h_causal | 0-pad] ---
    pad = jnp.zeros((N, OUT_LANES - (O + 2 * H)), jnp.float32)
    out_ref[...] = jnp.concatenate([out, h_temporal_final, h_causal_final, pad],
                                   axis=-1)


def _densify(edge_index, edge_attr, n):
    """Dense (dst, src) adjacency / edge-attr matrices.

    Replicates PyG GATConv's default add_self_loops=True: existing self-loops
    are removed, then self-loops are re-added with edge_attr = scatter-mean of
    the node's incoming edge attributes (fill_value='mean').
    """
    src = edge_index[0]
    dst = edge_index[1]
    vals = edge_attr[:, 0]
    keep = (src != dst).astype(jnp.float32)
    # TODO(synk): duplicate (src,dst) pairs are collapsed by the dense scatter;
    # the PyG reference softmaxes duplicate edges separately (inputs in
    # __main__ are generated without duplicates).
    adj = jnp.zeros((n, n), jnp.float32).at[dst, src].set(keep)
    ea = jnp.zeros((n, n), jnp.float32).at[dst, src].set(vals * keep)
    deg = jnp.zeros((n,), jnp.float32).at[dst].add(keep)
    ssum = jnp.zeros((n,), jnp.float32).at[dst].add(vals * keep)
    mean_attr = jnp.where(deg > 0, ssum / jnp.maximum(deg, 1.0), 0.0)
    diag = jnp.arange(n)
    adj = adj.at[diag, diag].set(1.0)
    ea = ea.at[diag, diag].set(mean_attr)
    return adj, ea


@jax.jit
def forward(packed, x, edge_index_t, edge_attr_t, edge_index_c, edge_attr_c):
    w_in, att, w_big, vec, e_coef_t, e_coef_c = packed
    n = x.shape[0]
    # TODO(synk): empty-edge fallback branch (h_* = zeros) not wired; inputs here
    # are non-empty (static edge counts > 0).
    adj_t, ea_t = _densify(edge_index_t, edge_attr_t, n)
    adj_c, ea_c = _densify(edge_index_c, edge_attr_c, n)
    # Fold the (constant) edge coefficient into the edge-attr matrices and pack
    # all four (N,N) graph inputs into one lane-concatenated (N, 4N) operand.
    graph = jnp.concatenate(
        [adj_t, ea_t * e_coef_t, adj_c, ea_c * e_coef_c], axis=-1)

    vmem = pl.BlockSpec(memory_space=pltpu.MemorySpace.VMEM)
    slab = pl.pallas_call(
        _gnn_kernel,
        out_shape=jax.ShapeDtypeStruct((n, OUT_LANES), jnp.float32),
        in_specs=[vmem] * 6,
        out_specs=vmem,
    )(x, graph, w_in, att, w_big, vec)
    # TODO(synk): if a batch of graphs/timesteps is available, add a leading
    # 'parallel' grid axis so v7x's second TensorCore is used.

    O, H = OUTPUT_DIM, HIDDEN_DIM
    out = slab[:, 0:O]
    h_temporal = slab[:, O:O + H]
    h_causal = slab[:, O + H:O + 2 * H]
    return out, h_temporal, h_causal


def init_params(key):
    """Deterministic synthetic parameters (shapes match the nn.Module __init__)."""
    D, H, O = INPUT_DIM, HIDDEN_DIM, OUTPUT_DIM
    keys = jax.random.split(key, 24)
    it = iter(keys)

    def n(shape, scale=0.1):
        return jax.random.normal(next(it), shape, jnp.float32) * scale

    def gat_params():
        return [
            n((D, H)),   # lin weight (used as x @ W)
            n((1, H)),   # att_src
            n((H, 1)),   # att_dst
            n((1, H)),   # att_edge
            n((1, H)),   # lin_edge weight (edge_dim = 1)
            n((1, H)),   # bias
        ]

    params = []
    params += gat_params()                                   # temporal GAT
    params += gat_params()                                   # causal GAT
    params += [n((H, 4 * H)), n((1, 4 * H))]                 # LSTM W_ih^T, (b_ih + b_hh)
    params += [n((H, H)), n((1, H)), n((H, H)), n((1, H))]   # MHA Wv^T, bv, Wo^T, bo
    params += [n((2 * H, H)), n((1, H))]                     # fusion Linear W^T, b
    params += [n((H, O)), n((1, O))]                         # output Linear W^T, b
    return params


def pack_params(params):
    """One-time packing of module parameters into 4 slabs + 2 scalars."""
    D, H, O = INPUT_DIM, HIDDEN_DIM, OUTPUT_DIM
    assert 4 * H <= 128 and H + O <= 128, "bias slab layout assumes H<=32, O<=96"
    (wt, ast, adt, aet, let_, bt,
     wc, asc, adc, aec, lec, bc,
     w_ih, b_lstm, wv, bv, wo, bo, wf, bf, wout, bout) = params

    # (D, 2H): both GAT input projections in one matmul.
    w_in = jnp.concatenate([wt, wc], axis=1)

    # (2H, 4): columns [att_dst_t, att_src_t, att_dst_c, att_src_c] over [h_t; h_c].
    z = jnp.zeros((H, 1), jnp.float32)
    att = jnp.concatenate([
        jnp.concatenate([adt, ast.T, z, z], axis=1),
        jnp.concatenate([z, z, adc, asc.T], axis=1),
    ], axis=0)

    # edge_dim == 1: alpha_edge(e) = e * sum(lin_edge_w * att_edge)  (constant).
    e_coef_t = jnp.sum(let_ * aet)
    e_coef_c = jnp.sum(lec * aec)

    # (H, 8H+O): [W_ih | Wv | Wo | Wf_t | Wf_c | Wout]
    w_big = jnp.concatenate(
        [w_ih, wv, wo, wf[:H, :], wf[H:, :], wout], axis=1)

    # (3, 128) lane-dense bias/vector slab.
    vec = jnp.zeros((3, 128), jnp.float32)
    vec = vec.at[0, 0:4 * H].set(b_lstm[0])
    vec = vec.at[1, 0:H].set(bt[0])
    vec = vec.at[1, H:2 * H].set(bc[0])
    vec = vec.at[1, 2 * H:3 * H].set(bv[0])
    vec = vec.at[1, 3 * H:4 * H].set(bo[0])
    vec = vec.at[2, 0:H].set(bf[0])
    vec = vec.at[2, H:H + O].set(bout[0])

    return w_in, att, w_big, vec, e_coef_t, e_coef_c


def _random_unique_edges(key, n, e):
    """e distinct (src, dst) pairs (dense densification collapses duplicates)."""
    flat = jax.random.choice(key, n * n, shape=(e,), replace=False)
    src = (flat // n).astype(jnp.int32)
    dst = (flat % n).astype(jnp.int32)
    return jnp.stack([src, dst])


if __name__ == "__main__":
    key = jax.random.PRNGKey(0)
    k_x, k_et, k_ec, k_at, k_ac, k_p = jax.random.split(key, 6)

    N = N_NODES
    x = jax.random.normal(k_x, (N, INPUT_DIM), jnp.float32)
    E_t, E_c = 40, 48
    edge_index_t = _random_unique_edges(k_et, N, E_t)
    edge_index_c = _random_unique_edges(k_ec, N, E_c)
    edge_attr_t = jax.random.normal(k_at, (E_t, 1), jnp.float32)
    edge_attr_c = jax.random.normal(k_ac, (E_c, 1), jnp.float32)

    params = init_params(k_p)
    packed = pack_params(params)

    out, h_temporal, h_causal = forward(
        packed, x, edge_index_t, edge_attr_t, edge_index_c, edge_attr_c)
    jax.block_until_ready((out, h_temporal, h_causal))

    assert out.shape == (N, OUTPUT_DIM)
    assert h_temporal.shape == (N, HIDDEN_DIM)
    assert h_causal.shape == (N, HIDDEN_DIM)
    assert bool(jnp.all(jnp.isfinite(out)))
    assert bool(jnp.all(jnp.isfinite(h_temporal)))
    assert bool(jnp.all(jnp.isfinite(h_causal)))
    print("KERNEL_OK")
</pallas_src>

<mosaic_0001>
module attributes {stable_mosaic.version = 11 : i64} {
  func.func private @main(%arg0: i32) attributes {dimension_semantics = [#tpu.dimension_semantics<core_parallel>], iteration_bounds = array<i64: 2>, tpu.core_type = #tpu.core_type<sc_scalar_subcore>, window_params = []} {
    return
  }
}

module attributes {stable_mosaic.version = 11 : i64} {
  func.func private @main(%arg0: i32) attributes {dimension_semantics = [#tpu.dimension_semantics<core_parallel>], iteration_bounds = array<i64: 2>, tpu.core_type = #tpu.core_type<sc_scalar_subcore>, window_params = []} {
    return
  }
}

module attributes {stable_mosaic.version = 11 : i64} {
  func.func @_gnn_kernel(%arg0: memref<16x16xf32, #tpu.memory_space<vmem>>, %arg1: memref<16x64xf32, #tpu.memory_space<vmem>>, %arg2: memref<16x64xf32, #tpu.memory_space<vmem>>, %arg3: memref<64x4xf32, #tpu.memory_space<vmem>>, %arg4: memref<32x272xf32, #tpu.memory_space<vmem>>, %arg5: memref<3x128xf32, #tpu.memory_space<vmem>>, %arg6: memref<16x128xf32, #tpu.memory_space<vmem>>) attributes {dimension_semantics = [], scalar_prefetch = 0 : i64, scratch_operands = 0 : i64, tpu.core_type = #tpu.core_type<tc>} {
    %c0 = arith.constant 0 : index
    %c0_0 = arith.constant 0 : index
    %0 = vector.load %arg0[%c0, %c0_0] : memref<16x16xf32, #tpu.memory_space<vmem>>, vector<16x16xf32>
    %c0_1 = arith.constant 0 : index
    %c0_2 = arith.constant 0 : index
    %1 = vector.load %arg1[%c0_1, %c0_2] : memref<16x64xf32, #tpu.memory_space<vmem>>, vector<16x64xf32>
    %2 = vector.extract_strided_slice %1 {offsets = [0, 0], sizes = [16, 16], strides = [1, 1]} : vector<16x64xf32> to vector<16x16xf32>
    %3 = vector.extract_strided_slice %1 {offsets = [0, 16], sizes = [16, 16], strides = [1, 1]} : vector<16x64xf32> to vector<16x16xf32>
    %4 = vector.extract_strided_slice %1 {offsets = [0, 32], sizes = [16, 16], strides = [1, 1]} : vector<16x64xf32> to vector<16x16xf32>
    %5 = vector.extract_strided_slice %1 {offsets = [0, 48], sizes = [16, 16], strides = [1, 1]} : vector<16x64xf32> to vector<16x16xf32>
    %c0_3 = arith.constant 0 : index
    %c0_4 = arith.constant 0 : index
    %6 = vector.load %arg4[%c0_3, %c0_4] : memref<32x272xf32, #tpu.memory_space<vmem>>, vector<32x272xf32>
    %c0_5 = arith.constant 0 : index
    %c0_6 = arith.constant 0 : index
    %7 = vector.load %arg5[%c0_5, %c0_6] : memref<3x128xf32, #tpu.memory_space<vmem>>, vector<3x128xf32>
    %c0_7 = arith.constant 0 : index
    %c0_8 = arith.constant 0 : index
    %8 = vector.load %arg2[%c0_7, %c0_8] : memref<16x64xf32, #tpu.memory_space<vmem>>, vector<16x64xf32>
    %cst = arith.constant dense<0.000000e+00> : vector<16x64xf32>
    %9 = tpu.matmul %0, %8, %cst {dimension_numbers = #tpu.dot_dimension_numbers<[1], [0], [0], [1], [0, 0, 1, 1], [], []>} : vector<16x16xf32>, vector<16x64xf32>, vector<16x64xf32> -> vector<16x64xf32>
    %10 = vector.extract_strided_slice %9 {offsets = [0, 0], sizes = [16, 32], strides = [1, 1]} : vector<16x64xf32> to vector<16x32xf32>
    %11 = vector.extract_strided_slice %9 {offsets = [0, 32], sizes = [16, 32], strides = [1, 1]} : vector<16x64xf32> to vector<16x32xf32>
    %c0_9 = arith.constant 0 : index
    %c0_10 = arith.constant 0 : index
    %12 = vector.load %arg3[%c0_9, %c0_10] : memref<64x4xf32, #tpu.memory_space<vmem>>, vector<64x4xf32>
    %cst_11 = arith.constant dense<0.000000e+00> : vector<16x4xf32>
    %13 = tpu.matmul %9, %12, %cst_11 {dimension_numbers = #tpu.dot_dimension_numbers<[1], [0], [0], [1], [0, 0, 1, 1], [], []>} : vector<16x64xf32>, vector<64x4xf32>, vector<16x4xf32> -> vector<16x4xf32>
    %14 = tpu.transpose %13, [1, 0] : vector<16x4xf32> -> vector<4x16xf32>
    %15 = vector.extract_strided_slice %13 {offsets = [0, 0], sizes = [16, 1], strides = [1, 1]} : vector<16x4xf32> to vector<16x1xf32>
    %16 = vector.extract_strided_slice %14 {offsets = [1, 0], sizes = [1, 16], strides = [1, 1]} : vector<4x16xf32> to vector<1x16xf32>
    %17 = vector.broadcast %15 : vector<16x1xf32> to vector<16x16xf32>
    %18 = vector.broadcast %16 : vector<1x16xf32> to vector<16x16xf32>
    %19 = arith.addf %17, %18 : vector<16x16xf32>
    %20 = arith.addf %19, %3 : vector<16x16xf32>
    %cst_12 = arith.constant 0.000000e+00 : f32
    %21 = vector.broadcast %cst_12 : f32 to vector<16x16xf32>
    %22 = arith.cmpf ogt, %20, %21 : vector<16x16xf32>
    %cst_13 = arith.constant 2.000000e-01 : f32
    %23 = vector.broadcast %cst_13 : f32 to vector<16x16xf32>
    %24 = arith.mulf %23, %20 : vector<16x16xf32>
    %25 = arith.select %22, %20, %24 : vector<16x16xi1>, vector<16x16xf32>
    %cst_14 = arith.constant 0.000000e+00 : f32
    %26 = vector.broadcast %cst_14 : f32 to vector<16x16xf32>
    %27 = arith.cmpf ogt, %2, %26 : vector<16x16xf32>
    %cst_15 = arith.constant -1.000000e+30 : f32
    %28 = vector.broadcast %cst_15 : f32 to vector<16x16xf32>
    %29 = arith.select %27, %25, %28 : vector<16x16xi1>, vector<16x16xf32>
    %cst_16 = arith.constant dense<0xFF800000> : vector<16xf32>
    %30 = vector.multi_reduction <maximumf>, %29, %cst_16 [1] : vector<16x16xf32> to vector<16xf32>
    %31 = vector.shape_cast %30 : vector<16xf32> to vector<16x1xf32>
    %32 = vector.broadcast %31 : vector<16x1xf32> to vector<16x16xf32>
    %33 = arith.subf %29, %32 : vector<16x16xf32>
    %34 = math.exp %33 : vector<16x16xf32>
    %cst_17 = arith.constant 0.000000e+00 : f32
    %35 = vector.broadcast %cst_17 : f32 to vector<16x16xf32>
    %36 = arith.select %27, %34, %35 : vector<16x16xi1>, vector<16x16xf32>
    %cst_18 = arith.constant dense<0.000000e+00> : vector<16xf32>
    %37 = vector.multi_reduction <add>, %36, %cst_18 [1] : vector<16x16xf32> to vector<16xf32>
    %38 = vector.shape_cast %37 : vector<16xf32> to vector<16x1xf32>
    %cst_19 = arith.constant 1.000000e-16 : f32
    %39 = vector.broadcast %cst_19 : f32 to vector<16x1xf32>
    %40 = arith.maximumf %38, %39 : vector<16x1xf32>
    %41 = vector.broadcast %40 : vector<16x1xf32> to vector<16x16xf32>
    %42 = arith.divf %36, %41 : vector<16x16xf32>
    %43 = vector.extract_strided_slice %13 {offsets = [0, 2], sizes = [16, 1], strides = [1, 1]} : vector<16x4xf32> to vector<16x1xf32>
    %44 = vector.extract_strided_slice %14 {offsets = [3, 0], sizes = [1, 16], strides = [1, 1]} : vector<4x16xf32> to vector<1x16xf32>
    %45 = vector.broadcast %43 : vector<16x1xf32> to vector<16x16xf32>
    %46 = vector.broadcast %44 : vector<1x16xf32> to vector<16x16xf32>
    %47 = arith.addf %45, %46 : vector<16x16xf32>
    %48 = arith.addf %47, %5 : vector<16x16xf32>
    %cst_20 = arith.constant 0.000000e+00 : f32
    %49 = vector.broadcast %cst_20 : f32 to vector<16x16xf32>
    %50 = arith.cmpf ogt, %48, %49 : vector<16x16xf32>
    %cst_21 = arith.constant 2.000000e-01 : f32
    %51 = vector.broadcast %cst_21 : f32 to vector<16x16xf32>
    %52 = arith.mulf %51, %48 : vector<16x16xf32>
    %53 = arith.select %50, %48, %52 : vector<16x16xi1>, vector<16x16xf32>
    %cst_22 = arith.constant 0.000000e+00 : f32
    %54 = vector.broadcast %cst_22 : f32 to vector<16x16xf32>
    %55 = arith.cmpf ogt, %4, %54 : vector<16x16xf32>
    %cst_23 = arith.constant -1.000000e+30 : f32
    %56 = vector.broadcast %cst_23 : f32 to vector<16x16xf32>
    %57 = arith.select %55, %53, %56 : vector<16x16xi1>, vector<16x16xf32>
    %cst_24 = arith.constant dense<0xFF800000> : vector<16xf32>
    %58 = vector.multi_reduction <maximumf>, %57, %cst_24 [1] : vector<16x16xf32> to vector<16xf32>
    %59 = vector.shape_cast %58 : vector<16xf32> to vector<16x1xf32>
    %60 = vector.broadcast %59 : vector<16x1xf32> to vector<16x16xf32>
    %61 = arith.subf %57, %60 : vector<16x16xf32>
    %62 = math.exp %61 : vector<16x16xf32>
    %cst_25 = arith.constant 0.000000e+00 : f32
    %63 = vector.broadcast %cst_25 : f32 to vector<16x16xf32>
    %64 = arith.select %55, %62, %63 : vector<16x16xi1>, vector<16x16xf32>
    %cst_26 = arith.constant dense<0.000000e+00> : vector<16xf32>
    %65 = vector.multi_reduction <add>, %64, %cst_26 [1] : vector<16x16xf32> to vector<16xf32>
    %66 = vector.shape_cast %65 : vector<16xf32> to vector<16x1xf32>
    %cst_27 = arith.constant 1.000000e-16 : f32
    %67 = vector.broadcast %cst_27 : f32 to vector<16x1xf32>
    %68 = arith.maximumf %66, %67 : vector<16x1xf32>
    %69 = vector.broadcast %68 : vector<16x1xf32> to vector<16x16xf32>
    %70 = arith.divf %64, %69 : vector<16x16xf32>
    %71 = vector.extract_strided_slice %7 {offsets = [1, 0], sizes = [1, 32], strides = [1, 1]} : vector<3x128xf32> to vector<1x32xf32>
    %72 = vector.extract_strided_slice %7 {offsets = [1, 32], sizes = [1, 32], strides = [1, 1]} : vector<3x128xf32> to vector<1x32xf32>
    %cst_28 = arith.constant dense<0.000000e+00> : vector<16x32xf32>
    %73 = tpu.matmul %42, %10, %cst_28 {dimension_numbers = #tpu.dot_dimension_numbers<[1], [0], [0], [1], [0, 0, 1, 1], [], []>} : vector<16x16xf32>, vector<16x32xf32>, vector<16x32xf32> -> vector<16x32xf32>
    %74 = vector.broadcast %71 : vector<1x32xf32> to vector<16x32xf32>
    %75 = arith.addf %73, %74 : vector<16x32xf32>
    %cst_29 = arith.constant dense<0.000000e+00> : vector<16x32xf32>
    %76 = tpu.matmul %70, %11, %cst_29 {dimension_numbers = #tpu.dot_dimension_numbers<[1], [0], [0], [1], [0, 0, 1, 1], [], []>} : vector<16x16xf32>, vector<16x32xf32>, vector<16x32xf32> -> vector<16x32xf32>
    %77 = vector.broadcast %72 : vector<1x32xf32> to vector<16x32xf32>
    %78 = arith.addf %76, %77 : vector<16x32xf32>
    %79 = vector.extract_strided_slice %7 {offsets = [0, 0], sizes = [1, 128], strides = [1, 1]} : vector<3x128xf32> to vector<1x128xf32>
    %80 = vector.extract_strided_slice %6 {offsets = [0, 0], sizes = [32, 128], strides = [1, 1]} : vector<32x272xf32> to vector<32x128xf32>
    %cst_30 = arith.constant dense<0.000000e+00> : vector<16x128xf32>
    %81 = tpu.matmul %75, %80, %cst_30 {dimension_numbers = #tpu.dot_dimension_numbers<[1], [0], [0], [1], [0, 0, 1, 1], [], []>} : vector<16x32xf32>, vector<32x128xf32>, vector<16x128xf32> -> vector<16x128xf32>
    %82 = vector.broadcast %79 : vector<1x128xf32> to vector<16x128xf32>
    %83 = arith.addf %81, %82 : vector<16x128xf32>
    %84 = vector.extract_strided_slice %83 {offsets = [0, 0], sizes = [16, 32], strides = [1, 1]} : vector<16x128xf32> to vector<16x32xf32>
    %85 = arith.negf %84 : vector<16x32xf32>
    %86 = math.exp %85 : vector<16x32xf32>
    %cst_31 = arith.constant 1.000000e+00 : f32
    %87 = vector.broadcast %cst_31 : f32 to vector<16x32xf32>
    %88 = arith.addf %87, %86 : vector<16x32xf32>
    %89 = arith.divf %87, %88 : vector<16x32xf32>
    %90 = vector.extract_strided_slice %83 {offsets = [0, 64], sizes = [16, 32], strides = [1, 1]} : vector<16x128xf32> to vector<16x32xf32>
    %91 = math.tanh %90 : vector<16x32xf32>
    %92 = vector.extract_strided_slice %83 {offsets = [0, 96], sizes = [16, 32], strides = [1, 1]} : vector<16x128xf32> to vector<16x32xf32>
    %93 = arith.negf %92 : vector<16x32xf32>
    %94 = math.exp %93 : vector<16x32xf32>
    %cst_32 = arith.constant 1.000000e+00 : f32
    %95 = vector.broadcast %cst_32 : f32 to vector<16x32xf32>
    %96 = arith.addf %95, %94 : vector<16x32xf32>
    %97 = arith.divf %95, %96 : vector<16x32xf32>
    %98 = arith.mulf %89, %91 : vector<16x32xf32>
    %99 = math.tanh %98 : vector<16x32xf32>
    %100 = arith.mulf %97, %99 : vector<16x32xf32>
    %101 = vector.extract_strided_slice %7 {offsets = [1, 64], sizes = [1, 32], strides = [1, 1]} : vector<3x128xf32> to vector<1x32xf32>
    %102 = vector.extract_strided_slice %7 {offsets = [1, 96], sizes = [1, 32], strides = [1, 1]} : vector<3x128xf32> to vector<1x32xf32>
    %103 = vector.extract_strided_slice %6 {offsets = [0, 128], sizes = [32, 32], strides = [1, 1]} : vector<32x272xf32> to vector<32x32xf32>
    %cst_33 = arith.constant dense<0.000000e+00> : vector<16x32xf32>
    %104 = tpu.matmul %78, %103, %cst_33 {dimension_numbers = #tpu.dot_dimension_numbers<[1], [0], [0], [1], [0, 0, 1, 1], [], []>} : vector<16x32xf32>, vector<32x32xf32>, vector<16x32xf32> -> vector<16x32xf32>
    %105 = vector.broadcast %101 : vector<1x32xf32> to vector<16x32xf32>
    %106 = arith.addf %104, %105 : vector<16x32xf32>
    %107 = vector.extract_strided_slice %6 {offsets = [0, 160], sizes = [32, 32], strides = [1, 1]} : vector<32x272xf32> to vector<32x32xf32>
    %cst_34 = arith.constant dense<0.000000e+00> : vector<16x32xf32>
    %108 = tpu.matmul %106, %107, %cst_34 {dimension_numbers = #tpu.dot_dimension_numbers<[1], [0], [0], [1], [0, 0, 1, 1], [], []>} : vector<16x32xf32>, vector<32x32xf32>, vector<16x32xf32> -> vector<16x32xf32>
    %109 = vector.broadcast %102 : vector<1x32xf32> to vector<16x32xf32>
    %110 = arith.addf %108, %109 : vector<16x32xf32>
    %111 = vector.extract_strided_slice %7 {offsets = [2, 0], sizes = [1, 32], strides = [1, 1]} : vector<3x128xf32> to vector<1x32xf32>
    %112 = vector.extract_strided_slice %7 {offsets = [2, 32], sizes = [1, 16], strides = [1, 1]} : vector<3x128xf32> to vector<1x16xf32>
    %113 = vector.extract_strided_slice %6 {offsets = [0, 192], sizes = [32, 32], strides = [1, 1]} : vector<32x272xf32> to vector<32x32xf32>
    %cst_35 = arith.constant dense<0.000000e+00> : vector<16x32xf32>
    %114 = tpu.matmul %100, %113, %cst_35 {dimension_numbers = #tpu.dot_dimension_numbers<[1], [0], [0], [1], [0, 0, 1, 1], [], []>} : vector<16x32xf32>, vector<32x32xf32>, vector<16x32xf32> -> vector<16x32xf32>
    %115 = vector.extract_strided_slice %6 {offsets = [0, 224], sizes = [32, 32], strides = [1, 1]} : vector<32x272xf32> to vector<32x32xf32>
    %cst_36 = arith.constant dense<0.000000e+00> : vector<16x32xf32>
    %116 = tpu.matmul %110, %115, %cst_36 {dimension_numbers = #tpu.dot_dimension_numbers<[1], [0], [0], [1], [0, 0, 1, 1], [], []>} : vector<16x32xf32>, vector<32x32xf32>, vector<16x32xf32> -> vector<16x32xf32>
    %117 = arith.addf %114, %116 : vector<16x32xf32>
    %118 = vector.broadcast %111 : vector<1x32xf32> to vector<16x32xf32>
    %119 = arith.addf %117, %118 : vector<16x32xf32>
    %cst_37 = arith.constant 0.000000e+00 : f32
    %120 = vector.broadcast %cst_37 : f32 to vector<16x32xf32>
    %121 = arith.maximumf %119, %120 : vector<16x32xf32>
    %122 = vector.extract_strided_slice %6 {offsets = [0, 256], sizes = [32, 16], strides = [1, 1]} : vector<32x272xf32> to vector<32x16xf32>
    %cst_38 = arith.constant dense<0.000000e+00> : vector<16x16xf32>
    %123 = tpu.matmul %121, %122, %cst_38 {dimension_numbers = #tpu.dot_dimension_numbers<[1], [0], [0], [1], [0, 0, 1, 1], [], []>} : vector<16x32xf32>, vector<32x16xf32>, vector<16x16xf32> -> vector<16x16xf32>
    %124 = vector.broadcast %112 : vector<1x16xf32> to vector<16x16xf32>
    %125 = arith.addf %123, %124 : vector<16x16xf32>
    %cst_39 = arith.constant 0.000000e+00 : f32
    %126 = vector.broadcast %cst_39 : f32 to vector<16x48xf32>
    %127 = tpu.concatenate %125, %100, %110, %126 in 1 : vector<16x16xf32>, vector<16x32xf32>, vector<16x32xf32>, vector<16x48xf32> -> vector<16x128xf32>
    %c0_40 = arith.constant 0 : index
    %c0_41 = arith.constant 0 : index
    %128 = vector.load %arg6[%c0_40, %c0_41] : memref<16x128xf32, #tpu.memory_space<vmem>>, vector<16x128xf32>
    tpu.vector_store %arg6[%c0_40, %c0_41], %127 {strides = array<i32>} : memref<16x128xf32, #tpu.memory_space<vmem>>, vector<16x128xf32>,
    return
  }
}

</mosaic_0001>

<llo_original>
// kernel: forward.1
$region0: #{forward.1}
  #allocation0 [shape = 'u32[]', space=smem, size = 0x4, offset = 0x4, fixed_abs, tag = 'smem constant byte address 0x4 - core index']
  #allocation1 [shape = 'u32[144,128]{1,0:T(1,128)}', space=vmem, size = 0x12000, scoped, tag = 'internal scratch']
  %s0 = inlined_call_operand.vmem [shape: f32[16,16], index: 0, kind: input, shape index: {}]
  %s1 = inlined_call_operand.vmem [shape: f32[16,64], index: 1, kind: input, shape index: {}]
  %s2 = inlined_call_operand.vmem [shape: f32[16,64], index: 2, kind: input, shape index: {}]
  %s3 = inlined_call_operand.vmem [shape: f32[64,4], index: 3, kind: input, shape index: {}]
  %s4 = inlined_call_operand.vmem [shape: f32[32,272], index: 4, kind: input, shape index: {}]
  %s5 = inlined_call_operand.vmem [shape: f32[3,128], index: 5, kind: input, shape index: {}]
  %s6 = inlined_call_operand.vmem [shape: f32[16,128], index: 6, kind: output, shape index: {}]
  %s7 = sld [smem:[#allocation0]]
  $region34: #{forward.1} parent=0
    _
  %s9 = ssub.s32 1, %s7
  %s10 = scalar_select 0, %s9, %s7
  // Predicated region
  $region2: #{forward.1} parent=0 // pred_check
    _
  $region3: #{forward.1} parent=0 // pred_check_branch
    %12 = sbr.rel (0) target = $region5
  $region4: #{forward.1} parent=0 // pred_region
    _
  $region5: #{forward.1} parent=0 // pred_fallthru
    _
  // Predicated region
  $region6: #{forward.1} parent=0 // pred_check
    _
  $region7: #{forward.1} parent=0 // pred_check_branch
    %14 = sbr.rel (0) target = $region9
  $region8: #{forward.1} parent=0 // pred_region
    _
  $region9: #{forward.1} parent=0 // pred_fallthru
    _
  // Predicated region
  $region10: #{forward.1} parent=0 // pred_check
    _
  $region11: #{forward.1} parent=0 // pred_check_branch
    %16 = sbr.rel (0) target = $region13
  $region12: #{forward.1} parent=0 // pred_region
    _
  $region13: #{forward.1} parent=0 // pred_fallthru
    _
  // Predicated region
  $region14: #{forward.1} parent=0 // pred_check
    _
  $region15: #{forward.1} parent=0 // pred_check_branch
    %18 = sbr.rel (0) target = $region17
  $region16: #{forward.1} parent=0 // pred_region
    _
  $region17: #{forward.1} parent=0 // pred_fallthru
    _
  // Predicated region
  $region18: #{forward.1} parent=0 // pred_check
    _
  $region19: #{forward.1} parent=0 // pred_check_branch
    %20 = sbr.rel (0) target = $region21
  $region20: #{forward.1} parent=0 // pred_region
    _
  $region21: #{forward.1} parent=0 // pred_fallthru
    _
  // Predicated region
  $region22: #{forward.1} parent=0 // pred_check
    _
  $region23: #{forward.1} parent=0 // pred_check_branch
    %22 = sbr.rel (0) target = $region25
  $region24: #{forward.1} parent=0 // pred_region
    _
  $region25: #{forward.1} parent=0 // pred_fallthru
    _
  %v23 = vld [vmem:[%s0] sm:$0xff]
  %v24 = vld [vmem:[%s0 + $0x8] sm:$0xff]
  %v25 = vld [vmem:[%s1] sm:$0xff]
  %v26 = vld [vmem:[%s1 + $0x8] sm:$0xff]
  %v27 = vld [vmem:[%s4] sm:$0xff]
  %v28 = vld [vmem:[%s4 + $0x8] sm:$0xff]
  %v29 = vld [vmem:[%s4 + $0x10] sm:$0xff]
  %v30 = vld [vmem:[%s4 + $0x18] sm:$0xff]
  %v31 = vld [vmem:[%s4 + $0x20] sm:$0xff]
  %v32 = vld [vmem:[%s4 + $0x28] sm:$0xff]
  %v33 = vld [vmem:[%s4 + $0x30] sm:$0xff]
  %v34 = vld [vmem:[%s4 + $0x38] sm:$0xff]
  %v35 = vld [vmem:[%s4 + $0x40] sm:$0xff]
  %v36 = vld [vmem:[%s4 + $0x48] sm:$0xff]
  %v37 = vld [vmem:[%s4 + $0x50] sm:$0xff]
  %v38 = vld [vmem:[%s4 + $0x58] sm:$0xff]
  %v39 = vld [vmem:[%s5] sm:$0x7]
  %v40 = vld [vmem:[%s2] sm:$0xff]
  %v41 = vld [vmem:[%s2 + $0x8] sm:$0xff]
  %vm42 = vcmask 130048
  %v44 = vsel %vm42, %v23, 0
  %v47 = vsel %vm42, %v24, 0
  %49 = vmatprep.subr.mxu0 0.0
  %50 = vmatpush1.msra.mxu0 %v40
  %51 = vmatprep.subr.mxu0 0.0
  %52 = vmatpush1.msra.mxu0 %v41
  %53 = vmatprep.subr.mxu0 0.0
  %54 = vmatpush1.msra.mxu0 0.0
  %55 = vmatprep.subr.mxu0 0.0
  %56 = vmatpush1.msra.mxu0 0.0
  %57 = vmatprep.subr.mxu0 0.0
  %58 = vmatpush1.msra.mxu0 0.0
  %59 = vmatprep.subr.mxu0 0.0
  %60 = vmatpush1.msra.mxu0 0.0
  %61 = vmatprep.subr.mxu0 0.0
  %62 = vmatpush1.msra.mxu0 0.0
  %63 = vmatprep.subr.mxu0 0.0
  %64 = vmatpush1.msra.mxu0 0.0
  %65 = vmatprep.subr.mxu0 0.0
  %66 = vmatpush1.msra.mxu0 0.0
  %67 = vmatprep.subr.mxu0 0.0
  %68 = vmatpush1.msra.mxu0 0.0
  %69 = vmatprep.subr.mxu0 0.0
  %70 = vmatpush1.msra.mxu0 0.0
  %71 = vmatprep.subr.mxu0 0.0
  %72 = vmatpush1.msra.mxu0 0.0
  %73 = vmatprep.subr.mxu0 0.0
  %74 = vmatpush1.msra.mxu0 0.0
  %75 = vmatprep.subr.mxu0 0.0
  %76 = vmatpush1.msra.mxu0 0.0
  %77 = vmatprep.subr.mxu0 0.0
  %78 = vmatpush1.msra.mxu0 0.0
  %79 = vmatprep.subr.mxu0 0.0
  %80 = vmatpush1.msra.mxu0 0.0
  %81 = vmatprep.subr.mxu0 0.0
  %82 = vmatpush1.msra.mxu0 0.0
  %83 = vmatprep.subr.mxu0 0.0
  %84 = vmatpush1.msra.mxu0 0.0
  %85 = vmatprep.subr.mxu0 0.0
  %86 = vmatpush1.msra.mxu0 0.0
  %87 = vmatprep.subr.mxu0 0.0
  %88 = vmatpush1.msra.mxu0 0.0
  %89 = vmatprep.subr.mxu0 0.0
  %90 = vmatpush1.msra.mxu0 0.0
  %91 = vmatprep.subr.mxu0 0.0
  %92 = vmatpush1.msra.mxu0 0.0
  %93 = vmatprep.subr.mxu0 0.0
  %94 = vmatpush1.msra.mxu0 0.0
  %95 = vmatprep.subr.mxu0 0.0
  %96 = vmatpush1.msra.mxu0 0.0
  %97 = vmatprep.subr.mxu0 0.0
  %98 = vmatpush1.msra.mxu0 0.0
  %99 = vmatprep.subr.mxu0 0.0
  %100 = vmatpush1.msra.mxu0 0.0
  %101 = vmatprep.subr.mxu0 0.0
  %102 = vmatpush1.msra.mxu0 0.0
  %103 = vmatprep.subr.mxu0 0.0
  %104 = vmatpush1.msra.mxu0 0.0
  %105 = vmatprep.subr.mxu0 0.0
  %106 = vmatpush1.msra.mxu0 0.0
  %107 = vmatprep.subr.mxu0 0.0
  %108 = vmatpush1.msra.mxu0 0.0
  %109 = vmatprep.subr.mxu0 0.0
  %110 = vmatpush1.msra.mxu0 0.0
  %111 = vmatprep.subr.mxu0 0.0
  %112 = vmatpush1.msra.mxu0 0.0
  %113 = vmatprep.mubr.f32.mxu0 0.0
  %114 = vmatmul.mubr.f32.gmra.mrb[0].mxu0 %v44
  %v115 = vpop.f32.mrb[0].mxu0
  %v116 = vadd.f32 0.0, %v115
  %v117 = vpop.f32.mrb[0].mxu0
  %118 = vmatprep.mubr.f32.mxu0 0.0
  %119 = vmatmul.mubr.f32.gmra.mrb[0].mxu0 %v47
  %v120 = vpop.f32.mrb[0].mxu0
  %v121 = vadd.f32 0.0, %v120
  %v122 = vpop.f32.mrb[0].mxu0
  %123 = vdwg.mxu0
  %v124 = vld [vmem:[%s3] sm:$0xff]
  %v125 = vld [vmem:[%s3 + $0x8] sm:$0xff]
  %v126 = vld [vmem:[%s3 + $0x10] sm:$0xff]
  %v127 = vld [vmem:[%s3 + $0x18] sm:$0xff]
  %v128 = vld [vmem:[%s3 + $0x20] sm:$0xff]
  %v129 = vld [vmem:[%s3 + $0x28] sm:$0xff]
  %v130 = vld [vmem:[%s3 + $0x30] sm:$0xff]
  %v131 = vld [vmem:[%s3 + $0x38] sm:$0xff]
  %vm132 = vcmask 523264
  %v134 = vsel %vm132, %v116, 0
  %v137 = vsel %vm132, %v121, 0
  %139 = vmatprep.subr.mxu0 0.0
  %140 = vmatpush1.msra.mxu0 %v124
  %141 = vmatprep.subr.mxu0 0.0
  %142 = vmatpush1.msra.mxu0 %v125
  %143 = vmatprep.subr.mxu0 0.0
  %144 = vmatpush1.msra.mxu0 %v126
  %145 = vmatprep.subr.mxu0 0.0
  %146 = vmatpush1.msra.mxu0 %v127
  %147 = vmatprep.subr.mxu0 0.0
  %148 = vmatpush1.msra.mxu0 %v128
  %149 = vmatprep.subr.mxu0 0.0
  %150 = vmatpush1.msra.mxu0 %v129
  %151 = vmatprep.subr.mxu0 0.0
  %152 = vmatpush1.msra.mxu0 %v130
  %153 = vmatprep.subr.mxu0 0.0
  %154 = vmatpush1.msra.mxu0 %v131
  %155 = vmatprep.subr.mxu0 0.0
  %156 = vmatpush1.msra.mxu0 0.0
  %157 = vmatprep.subr.mxu0 0.0
  %158 = vmatpush1.msra.mxu0 0.0
  %159 = vmatprep.subr.mxu0 0.0
  %160 = vmatpush1.msra.mxu0 0.0
  %161 = vmatprep.subr.mxu0 0.0
  %162 = vmatpush1.msra.mxu0 0.0
  %163 = vmatprep.subr.mxu0 0.0
  %164 = vmatpush1.msra.mxu0 0.0
  %165 = vmatprep.subr.mxu0 0.0
  %166 = vmatpush1.msra.mxu0 0.0
  %167 = vmatprep.subr.mxu0 0.0
  %168 = vmatpush1.msra.mxu0 0.0
  %169 = vmatprep.subr.mxu0 0.0
  %170 = vmatpush1.msra.mxu0 0.0
  %171 = vmatprep.subr.mxu0 0.0
  %172 = vmatpush1.msra.mxu0 0.0
  %173 = vmatprep.subr.mxu0 0.0
  %174 = vmatpush1.msra.mxu0 0.0
  %175 = vmatprep.subr.mxu0 0.0
  %176 = vmatpush1.msra.mxu0 0.0
  %177 = vmatprep.subr.mxu0 0.0
  %178 = vmatpush1.msra.mxu0 0.0
  %179 = vmatprep.subr.mxu0 0.0
  %180 = vmatpush1.msra.mxu0 0.0
  %181 = vmatprep.subr.mxu0 0.0
  %182 = vmatpush1.msra.mxu0 0.0
  %183 = vmatprep.subr.mxu0 0.0
  %184 = vmatpush1.msra.mxu0 0.0
  %185 = vmatprep.subr.mxu0 0.0
  %186 = vmatpush1.msra.mxu0 0.0
  %187 = vmatprep.subr.mxu0 0.0
  %188 = vmatpush1.msra.mxu0 0.0
  %189 = vmatprep.subr.mxu0 0.0
  %190 = vmatpush1.msra.mxu0 0.0
  %191 = vmatprep.subr.mxu0 0.0
  %192 = vmatpush1.msra.mxu0 0.0
  %193 = vmatprep.subr.mxu0 0.0
  %194 = vmatpush1.msra.mxu0 0.0
  %195 = vmatprep.subr.mxu0 0.0
  %196 = vmatpush1.msra.mxu0 0.0
  %197 = vmatprep.subr.mxu0 0.0
  %198 = vmatpush1.msra.mxu0 0.0
  %199 = vmatprep.subr.mxu0 0.0
  %200 = vmatpush1.msra.mxu0 0.0
  %201 = vmatprep.subr.mxu0 0.0
  %202 = vmatpush1.msra.mxu0 0.0
  %203 = vmatprep.mubr.f32.mxu0 0.0
  %204 = vmatmul.mubr.f32.gmra.mrb[0].mxu0 %v134
  %v205 = vpop.f32.mrb[0].mxu0
  %v206 = vadd.f32 0.0, %v205
  %v207 = vpop.f32.mrb[0].mxu0
  %208 = vmatprep.mubr.f32.mxu0 0.0
  %209 = vmatmul.mubr.f32.gmra.mrb[0].mxu0 %v137
  %v210 = vpop.f32.mrb[0].mxu0
  %v211 = vadd.f32 0.0, %v210
  %v212 = vpop.f32.mrb[0].mxu0
  %213 = vdwg.mxu0
  %214 = vxpose.xlu0.b32.start [1/16] %v206, 128
  %215 = vxpose.xlu0.b32.cont [2/16] %v211, 128
  %216 = vxpose.xlu0.b32.cont [3/16] 0.0, 128
  %217 = vxpose.xlu0.b32.cont [4/16] 0.0, 128
  %218 = vxpose.xlu0.b32.cont [5/16] 0.0, 128
  %219 = vxpose.xlu0.b32.cont [6/16] 0.0, 128
  %220 = vxpose.xlu0.b32.cont [7/16] 0.0, 128
  %221 = vxpose.xlu0.b32.cont [8/16] 0.0, 128
  %222 = vxpose.xlu0.b32.cont [9/16] 0.0, 128
  %223 = vxpose.xlu0.b32.cont [10/16] 0.0, 128
  %224 = vxpose.xlu0.b32.cont [11/16] 0.0, 128
  %225 = vxpose.xlu0.b32.cont [12/16] 0.0, 128
  %226 = vxpose.xlu0.b32.cont [13/16] 0.0, 128
  %227 = vxpose.xlu0.b32.cont [14/16] 0.0, 128
  %228 = vxpose.xlu0.b32.cont [15/16] 0.0, 128
  %229 = vxpose.xlu0.b32.end [16/16] 0.0, 128
  %v230 = vpop.trf.xlu0
  %v231 = vpop.trf.xlu0
  %v232 = vpop.trf.xlu0
  %v233 = vpop.trf.xlu0
  %v234 = vpop.trf.xlu0
  %v235 = vpop.trf.xlu0
  %v236 = vpop.trf.xlu0
  %v237 = vpop.trf.xlu0
  %v238 = vpop.trf.xlu0
  %v239 = vpop.trf.xlu0
  %v240 = vpop.trf.xlu0
  %v241 = vpop.trf.xlu0
  %v242 = vpop.trf.xlu0
  %v243 = vpop.trf.xlu0
  %v244 = vpop.trf.xlu0
  %v245 = vpop.trf.xlu0
  %247 = vset.pattern.permute.xlu0 0
  %248 = vperm.xlu0 %247, %v206
  %v249 = vpop.permute.xlu0 %248
  %252 = vset.pattern.permute.xlu0 0
  %253 = vperm.xlu0 %252, %v211
  %v254 = vpop.permute.xlu0 %253
  %v256 = vlaneseq
  %v257 = vshrl.u32 %v256, 7
  %v258 = vsub.s32 1, %v257
  %v259 = vrot.slane %v230, %v258
  %v260 = vadd.f32 %v249, %v259
  %v261 = vadd.f32 %v254, %v259
  %264 = vrot.lane.b32.xlu0 %v25, 112
  %v265 = vpop.permute.xlu0 %264
  %266 = vrot.lane.b32.xlu0 %v26, 112
  %v267 = vpop.permute.xlu0 %266
  %v270 = vadd.f32 %v260, %v265
  %v271 = vadd.f32 %v261, %v267
  %vm272 = vcmp.gt.f32.partialorder %v270, 0.0
  %vm273 = vcmp.gt.f32.partialorder %v271, 0.0
  %v274 = vmul.f32 %v270, 0.2
  %v275 = vmul.f32 %v271, 0.2
  %v276 = vsel %vm272, %v270, %v274
  %v277 = vsel %vm273, %v271, %v275
  %vm278 = vcmp.gt.f32.partialorder %v25, 0.0
  %vm279 = vcmp.gt.f32.partialorder %v26, 0.0
  %v280 = vsel %vm278, %v276, -1e+30
  %v281 = vsel %vm279, %v277, -1e+30
  %v282 = vsel %vm42, %v280, -inf
  %283 = vmax.xlane.f32.xlu0 %v282
  %v284 = vpop.xlane.xlu0 %283
  %v285 = vsel %vm42, %v281, -inf
  %286 = vmax.xlane.f32.xlu0 %v285
  %v287 = vpop.xlane.xlu0 %286
  %v288 = vsub.f32 %v280, %v284
  %v289 = vsub.f32 %v281, %v287
  %v290 = vmul.f32 %v288, 1.442695
  %v291 = vpow.pop %v290
  %v292 = vmul.f32 %v289, 1.442695
  %v293 = vpow.pop %v292
  %v294 = vsel %vm278, %v291, 0.0
  %v295 = vsel %vm279, %v293, 0.0
  %v296 = vsel %vm42, %v294, 0.0
  %297 = vadd.xlane.f32.xlu0 %v296
  %v298 = vpop.xlane.xlu0 %297
  %v299 = vsel %vm42, %v295, 0.0
  %300 = vadd.xlane.f32.xlu0 %v299
  %v301 = vpop.xlane.xlu0 %300
  %v302 = vmax.f32 %v298, 1e-16
  %v303 = vmax.f32 %v301, 1e-16
  %v304 = vrcp.pop %v302
  %v305 = vmul.f32 %v294, %v304
  %v306 = vrcp.pop %v303
  %v307 = vmul.f32 %v295, %v306
  %308 = vset.pattern.permute.xlu0 2
  %309 = vperm.xlu0 %308, %v206
  %v310 = vpop.permute.xlu0 %309
  %312 = vset.pattern.permute.xlu0 2
  %313 = vperm.xlu0 %312, %v211
  %v314 = vpop.permute.xlu0 %313
  %v316 = vlaneseq
  %v317 = vshrl.u32 %v316, 7
  %v318 = vsub.s32 3, %v317
  %v319 = vrot.slane %v230, %v318
  %v320 = vadd.f32 %v310, %v319
  %v321 = vadd.f32 %v314, %v319
  %322 = vrot.lane.b32.xlu0 %v25, 80
  %v323 = vpop.permute.xlu0 %322
  %324 = vrot.lane.b32.xlu0 %v26, 80
  %v325 = vpop.permute.xlu0 %324
  %v328 = vadd.f32 %v320, %v323
  %v329 = vadd.f32 %v321, %v325
  %vm330 = vcmp.gt.f32.partialorder %v328, 0.0
  %vm331 = vcmp.gt.f32.partialorder %v329, 0.0
  %v332 = vmul.f32 %v328, 0.2
  %v333 = vmul.f32 %v329, 0.2
  %v334 = vsel %vm330, %v328, %v332
  %v335 = vsel %vm331, %v329, %v333
  %338 = vrot.lane.b32.xlu0 %v334, 32
  %v339 = vpop.permute.xlu0 %338
  %340 = vrot.lane.b32.xlu0 %v335, 32
  %v341 = vpop.permute.xlu0 %340
  %v344 = vsel %vm278, %v339, -1e+30
  %v345 = vsel %vm279, %v341, -1e+30
  %vm346 = vcmask 392448
  %v347 = vsel %vm346, %v344, -inf
  %348 = vmax.xlane.f32.xlu0 %v347
  %v349 = vpop.xlane.xlu0 %348
  %v350 = vsel %vm346, %v345, -inf
  %351 = vmax.xlane.f32.xlu0 %v350
  %v352 = vpop.xlane.xlu0 %351
  %v353 = vsub.f32 %v344, %v349
  %v354 = vsub.f32 %v345, %v352
  %v355 = vmul.f32 %v353, 1.442695
  %v356 = vpow.pop %v355
  %v357 = vmul.f32 %v354, 1.442695
  %v358 = vpow.pop %v357
  %v359 = vsel %vm278, %v356, 0.0
  %v360 = vsel %vm279, %v358, 0.0
  %363 = vrot.lane.b32.xlu0 %v359, 96
  %v364 = vpop.permute.xlu0 %363
  %365 = vrot.lane.b32.xlu0 %v360, 96
  %v366 = vpop.permute.xlu0 %365
  %v369 = vsel %vm42, %v364, 0.0
  %370 = vadd.xlane.f32.xlu0 %v369
  %v371 = vpop.xlane.xlu0 %370
  %v372 = vsel %vm42, %v366, 0.0
  %373 = vadd.xlane.f32.xlu0 %v372
  %v374 = vpop.xlane.xlu0 %373
  %v375 = vmax.f32 %v371, 1e-16
  %v376 = vmax.f32 %v374, 1e-16
  %v377 = vrcp.pop %v375
  %v378 = vmul.f32 %v359, %v377
  %v379 = vrcp.pop %v376
  %v380 = vmul.f32 %v360, %v379
  %v381 = vlaneseq
  %v382 = vshrl.u32 %v381, 7
  %v383 = vsub.s32 1, %v382
  %v384 = vrot.slane %v39, %v383
  %v386 = vsel %vm42, %v305, 0
  %v389 = vsel %vm42, %v307, 0
  %391 = vmatprep.subr.mxu0 0.0
  %392 = vmatpush1.msra.mxu0 %v116
  %393 = vmatprep.subr.mxu0 0.0
  %394 = vmatpush1.msra.mxu0 %v121
  %395 = vmatprep.subr.mxu0 0.0
  %396 = vmatpush1.msra.mxu0 0.0
  %397 = vmatprep.subr.mxu0 0.0
  %398 = vmatpush1.msra.mxu0 0.0
  %399 = vmatprep.subr.mxu0 0.0
  %400 = vmatpush1.msra.mxu0 0.0
  %401 = vmatprep.subr.mxu0 0.0
  %402 = vmatpush1.msra.mxu0 0.0
  %403 = vmatprep.subr.mxu0 0.0
  %404 = vmatpush1.msra.mxu0 0.0
  %405 = vmatprep.subr.mxu0 0.0
  %406 = vmatpush1.msra.mxu0 0.0
  %407 = vmatprep.subr.mxu0 0.0
  %408 = vmatpush1.msra.mxu0 0.0
  %409 = vmatprep.subr.mxu0 0.0
  %410 = vmatpush1.msra.mxu0 0.0
  %411 = vmatprep.subr.mxu0 0.0
  %412 = vmatpush1.msra.mxu0 0.0
  %413 = vmatprep.subr.mxu0 0.0
  %414 = vmatpush1.msra.mxu0 0.0
  %415 = vmatprep.subr.mxu0 0.0
  %416 = vmatpush1.msra.mxu0 0.0
  %417 = vmatprep.subr.mxu0 0.0
  %418 = vmatpush1.msra.mxu0 0.0
  %419 = vmatprep.subr.mxu0 0.0
  %420 = vmatpush1.msra.mxu0 0.0
  %421 = vmatprep.subr.mxu0 0.0
  %422 = vmatpush1.msra.mxu0 0.0
  %423 = vmatprep.subr.mxu0 0.0
  %424 = vmatpush1.msra.mxu0 0.0
  %425 = vmatprep.subr.mxu0 0.0
  %426 = vmatpush1.msra.mxu0 0.0
  %427 = vmatprep.subr.mxu0 0.0
  %428 = vmatpush1.msra.mxu0 0.0
  %429 = vmatprep.subr.mxu0 0.0
  %430 = vmatpush1.msra.mxu0 0.0
  %431 = vmatprep.subr.mxu0 0.0
  %432 = vmatpush1.msra.mxu0 0.0
  %433 = vmatprep.subr.mxu0 0.0
  %434 = vmatpush1.msra.mxu0 0.0
  %435 = vmatprep.subr.mxu0 0.0
  %436 = vmatpush1.msra.mxu0 0.0
  %437 = vmatprep.subr.mxu0 0.0
  %438 = vmatpush1.msra.mxu0 0.0
  %439 = vmatprep.subr.mxu0 0.0
  %440 = vmatpush1.msra.mxu0 0.0
  %441 = vmatprep.subr.mxu0 0.0
  %442 = vmatpush1.msra.mxu0 0.0
  %443 = vmatprep.subr.mxu0 0.0
  %444 = vmatpush1.msra.mxu0 0.0
  %445 = vmatprep.subr.mxu0 0.0
  %446 = vmatpush1.msra.mxu0 0.0
  %447 = vmatprep.subr.mxu0 0.0
  %448 = vmatpush1.msra.mxu0 0.0
  %449 = vmatprep.subr.mxu0 0.0
  %450 = vmatpush1.msra.mxu0 0.0
  %451 = vmatprep.subr.mxu0 0.0
  %452 = vmatpush1.msra.mxu0 0.0
  %453 = vmatprep.subr.mxu0 0.0
  %454 = vmatpush1.msra.mxu0 0.0
  %455 = vmatprep.mubr.f32.mxu0 0.0
  %456 = vmatmul.mubr.f32.gmra.mrb[0].mxu0 %v386
  %v457 = vpop.f32.mrb[0].mxu0
  %v458 = vadd.f32 %v384, %v457
  %v459 = vpop.f32.mrb[0].mxu0
  %460 = vmatprep.mubr.f32.mxu0 0.0
  %461 = vmatmul.mubr.f32.gmra.mrb[0].mxu0 %v389
  %v462 = vpop.f32.mrb[0].mxu0
  %v463 = vadd.f32 %v384, %v462
  %v464 = vpop.f32.mrb[0].mxu0
  %465 = vdwg.mxu0
  %468 = vrot.lane.b32.xlu0 %v378, 96
  %v469 = vpop.permute.xlu0 %468
  %470 = vrot.lane.b32.xlu0 %v380, 96
  %v471 = vpop.permute.xlu0 %470
  %472 = vrot.lane.b32.xlu0 %v116, 96
  %v473 = vpop.permute.xlu0 %472
  %474 = vrot.lane.b32.xlu0 %v121, 96
  %v475 = vpop.permute.xlu0 %474
  %479 = vrot.lane.b32.xlu0 %v384, 96
  %v480 = vpop.permute.xlu0 %479
  %v482 = vsel %vm42, %v469, 0
  %v484 = vsel %vm42, %v471, 0
  %486 = vmatprep.subr.mxu0 0.0
  %487 = vmatpush1.msra.mxu0 %v473
  %488 = vmatprep.subr.mxu0 0.0
  %489 = vmatpush1.msra.mxu0 %v475
  %490 = vmatprep.subr.mxu0 0.0
  %491 = vmatpush1.msra.mxu0 0.0
  %492 = vmatprep.subr.mxu0 0.0
  %493 = vmatpush1.msra.mxu0 0.0
  %494 = vmatprep.subr.mxu0 0.0
  %495 = vmatpush1.msra.mxu0 0.0
  %496 = vmatprep.subr.mxu0 0.0
  %497 = vmatpush1.msra.mxu0 0.0
  %498 = vmatprep.subr.mxu0 0.0
  %499 = vmatpush1.msra.mxu0 0.0
  %500 = vmatprep.subr.mxu0 0.0
  %501 = vmatpush1.msra.mxu0 0.0
  %502 = vmatprep.subr.mxu0 0.0
  %503 = vmatpush1.msra.mxu0 0.0
  %504 = vmatprep.subr.mxu0 0.0
  %505 = vmatpush1.msra.mxu0 0.0
  %506 = vmatprep.subr.mxu0 0.0
  %507 = vmatpush1.msra.mxu0 0.0
  %508 = vmatprep.subr.mxu0 0.0
  %509 = vmatpush1.msra.mxu0 0.0
  %510 = vmatprep.subr.mxu0 0.0
  %511 = vmatpush1.msra.mxu0 0.0
  %512 = vmatprep.subr.mxu0 0.0
  %513 = vmatpush1.msra.mxu0 0.0
  %514 = vmatprep.subr.mxu0 0.0
  %515 = vmatpush1.msra.mxu0 0.0
  %516 = vmatprep.subr.mxu0 0.0
  %517 = vmatpush1.msra.mxu0 0.0
  %518 = vmatprep.subr.mxu0 0.0
  %519 = vmatpush1.msra.mxu0 0.0
  %520 = vmatprep.subr.mxu0 0.0
  %521 = vmatpush1.msra.mxu0 0.0
  %522 = vmatprep.subr.mxu0 0.0
  %523 = vmatpush1.msra.mxu0 0.0
  %524 = vmatprep.subr.mxu0 0.0
  %525 = vmatpush1.msra.mxu0 0.0
  %526 = vmatprep.subr.mxu0 0.0
  %527 = vmatpush1.msra.mxu0 0.0
  %528 = vmatprep.subr.mxu0 0.0
  %529 = vmatpush1.msra.mxu0 0.0
  %530 = vmatprep.subr.mxu0 0.0
  %531 = vmatpush1.msra.mxu0 0.0
  %532 = vmatprep.subr.mxu0 0.0
  %533 = vmatpush1.msra.mxu0 0.0
  %534 = vmatprep.subr.mxu0 0.0
  %535 = vmatpush1.msra.mxu0 0.0
  %536 = vmatprep.subr.mxu0 0.0
  %537 = vmatpush1.msra.mxu0 0.0
  %538 = vmatprep.subr.mxu0 0.0
  %539 = vmatpush1.msra.mxu0 0.0
  %540 = vmatprep.subr.mxu0 0.0
  %541 = vmatpush1.msra.mxu0 0.0
  %542 = vmatprep.subr.mxu0 0.0
  %543 = vmatpush1.msra.mxu0 0.0
  %544 = vmatprep.subr.mxu0 0.0
  %545 = vmatpush1.msra.mxu0 0.0
  %546 = vmatprep.subr.mxu0 0.0
  %547 = vmatpush1.msra.mxu0 0.0
  %548 = vmatprep.subr.mxu0 0.0
  %549 = vmatpush1.msra.mxu0 0.0
  %550 = vmatprep.mubr.f32.mxu0 0.0
  %551 = vmatmul.mubr.f32.gmra.mrb[0].mxu0 %v482
  %v552 = vpop.f32.mrb[0].mxu0
  %v553 = vadd.f32 %v480, %v552
  %v554 = vpop.f32.mrb[0].mxu0
  %555 = vmatprep.mubr.f32.mxu0 0.0
  %556 = vmatmul.mubr.f32.gmra.mrb[0].mxu0 %v484
  %v557 = vpop.f32.mrb[0].mxu0
  %v558 = vadd.f32 %v480, %v557
  %v559 = vpop.f32.mrb[0].mxu0
  %560 = vdwg.mxu0
  %v561 = vlaneseq
  %v562 = vshrl.u32 %v561, 7
  %v563 = vsub.s32 0, %v562
  %v564 = vrot.slane %v39, %v563
  %vm565 = vcmask 261120
  %v567 = vsel %vm565, %v458, 0
  %v570 = vsel %vm565, %v463, 0
  %572 = vmatprep.subr.mxu0 0.0
  %573 = vmatpush1.msra.mxu0 %v27
  %574 = vmatprep.subr.mxu0 0.0
  %575 = vmatpush1.msra.mxu0 %v30
  %576 = vmatprep.subr.mxu0 0.0
  %577 = vmatpush1.msra.mxu0 %v33
  %578 = vmatprep.subr.mxu0 0.0
  %579 = vmatpush1.msra.mxu0 %v36
  %580 = vmatprep.subr.mxu0 0.0
  %581 = vmatpush1.msra.mxu0 0.0
  %582 = vmatprep.subr.mxu0 0.0
  %583 = vmatpush1.msra.mxu0 0.0
  %584 = vmatprep.subr.mxu0 0.0
  %585 = vmatpush1.msra.mxu0 0.0
  %586 = vmatprep.subr.mxu0 0.0
  %587 = vmatpush1.msra.mxu0 0.0
  %588 = vmatprep.subr.mxu0 0.0
  %589 = vmatpush1.msra.mxu0 0.0
  %590 = vmatprep.subr.mxu0 0.0
  %591 = vmatpush1.msra.mxu0 0.0
  %592 = vmatprep.subr.mxu0 0.0
  %593 = vmatpush1.msra.mxu0 0.0
  %594 = vmatprep.subr.mxu0 0.0
  %595 = vmatpush1.msra.mxu0 0.0
  %596 = vmatprep.subr.mxu0 0.0
  %597 = vmatpush1.msra.mxu0 0.0
  %598 = vmatprep.subr.mxu0 0.0
  %599 = vmatpush1.msra.mxu0 0.0
  %600 = vmatprep.subr.mxu0 0.0
  %601 = vmatpush1.msra.mxu0 0.0
  %602 = vmatprep.subr.mxu0 0.0
  %603 = vmatpush1.msra.mxu0 0.0
  %604 = vmatprep.subr.mxu0 0.0
  %605 = vmatpush1.msra.mxu0 0.0
  %606 = vmatprep.subr.mxu0 0.0
  %607 = vmatpush1.msra.mxu0 0.0
  %608 = vmatprep.subr.mxu0 0.0
  %609 = vmatpush1.msra.mxu0 0.0
  %610 = vmatprep.subr.mxu0 0.0
  %611 = vmatpush1.msra.mxu0 0.0
  %612 = vmatprep.subr.mxu0 0.0
  %613 = vmatpush1.msra.mxu0 0.0
  %614 = vmatprep.subr.mxu0 0.0
  %615 = vmatpush1.msra.mxu0 0.0
  %616 = vmatprep.subr.mxu0 0.0
  %617 = vmatpush1.msra.mxu0 0.0
  %618 = vmatprep.subr.mxu0 0.0
  %619 = vmatpush1.msra.mxu0 0.0
  %620 = vmatprep.subr.mxu0 0.0
  %621 = vmatpush1.msra.mxu0 0.0
  %622 = vmatprep.subr.mxu0 0.0
  %623 = vmatpush1.msra.mxu0 0.0
  %624 = vmatprep.subr.mxu0 0.0
  %625 = vmatpush1.msra.mxu0 0.0
  %626 = vmatprep.subr.mxu0 0.0
  %627 = vmatpush1.msra.mxu0 0.0
  %628 = vmatprep.subr.mxu0 0.0
  %629 = vmatpush1.msra.mxu0 0.0
  %630 = vmatprep.subr.mxu0 0.0
  %631 = vmatpush1.msra.mxu0 0.0
  %632 = vmatprep.subr.mxu0 0.0
  %633 = vmatpush1.msra.mxu0 0.0
  %634 = vmatprep.subr.mxu0 0.0
  %635 = vmatpush1.msra.mxu0 0.0
  %636 = vmatprep.mubr.f32.mxu0 0.0
  %637 = vmatmul.mubr.f32.gmra.mrb[0].mxu0 %v567
  %v638 = vpop.f32.mrb[0].mxu0
  %v639 = vadd.f32 %v564, %v638
  %v640 = vpop.f32.mrb[0].mxu0
  %641 = vmatprep.mubr.f32.mxu0 0.0
  %642 = vmatmul.mubr.f32.gmra.mrb[0].mxu0 %v570
  %v643 = vpop.f32.mrb[0].mxu0
  %v644 = vadd.f32 %v564, %v643
  %v645 = vpop.f32.mrb[0].mxu0
  %646 = vdwg.mxu0
  %v647 = vxor.u32 %v639, 2147483648
  %v648 = vxor.u32 %v644, 2147483648
  %v649 = vmul.f32 %v647, 1.442695
  %v650 = vpow.pop %v649
  %v651 = vmul.f32 %v648, 1.442695
  %v652 = vpow.pop %v651
  %v653 = vadd.f32 %v650, 1.0
  %v654 = vadd.f32 %v652, 1.0
  %v655 = vrcp.pop %v653
  %v656 = vmul.f32 1.0, %v655
  %v657 = vrcp.pop %v654
  %v658 = vmul.f32 1.0, %v657
  %v659 = vtanh.pop %v639
  %v660 = vtanh.pop %v644
  %663 = vrot.lane.b32.xlu0 %v659, 64
  %v664 = vpop.permute.xlu0 %663
  %665 = vrot.lane.b32.xlu0 %v660, 64
  %v666 = vpop.permute.xlu0 %665
  %v669 = vmul.f32 %v656, %v664
  %v670 = vmul.f32 %v658, %v666
  %v671 = vtanh.pop %v669
  %v672 = vtanh.pop %v670
  %675 = vrot.lane.b32.xlu0 %v671, 96
  %v676 = vpop.permute.xlu0 %675
  %677 = vrot.lane.b32.xlu0 %v672, 96
  %v678 = vpop.permute.xlu0 %677
  %v681 = vmul.f32 %v656, %v676
  %v682 = vmul.f32 %v658, %v678
  %683 = vrot.lane.b32.xlu0 %v384, 64
  %v684 = vpop.permute.xlu0 %683
  %v687 = vsel %vm565, %v553, 0
  %v690 = vsel %vm565, %v558, 0
  %692 = vmatprep.subr.mxu0 0.0
  %693 = vmatpush1.msra.mxu0 %v28
  %694 = vmatprep.subr.mxu0 0.0
  %695 = vmatpush1.msra.mxu0 %v31
  %696 = vmatprep.subr.mxu0 0.0
  %697 = vmatpush1.msra.mxu0 %v34
  %698 = vmatprep.subr.mxu0 0.0
  %699 = vmatpush1.msra.mxu0 %v37
  %700 = vmatprep.subr.mxu0 0.0
  %701 = vmatpush1.msra.mxu0 0.0
  %702 = vmatprep.subr.mxu0 0.0
  %703 = vmatpush1.msra.mxu0 0.0
  %704 = vmatprep.subr.mxu0 0.0
  %705 = vmatpush1.msra.mxu0 0.0
  %706 = vmatprep.subr.mxu0 0.0
  %707 = vmatpush1.msra.mxu0 0.0
  %708 = vmatprep.subr.mxu0 0.0
  %709 = vmatpush1.msra.mxu0 0.0
  %710 = vmatprep.subr.mxu0 0.0
  %711 = vmatpush1.msra.mxu0 0.0
  %712 = vmatprep.subr.mxu0 0.0
  %713 = vmatpush1.msra.mxu0 0.0
  %714 = vmatprep.subr.mxu0 0.0
  %715 = vmatpush1.msra.mxu0 0.0
  %716 = vmatprep.subr.mxu0 0.0
  %717 = vmatpush1.msra.mxu0 0.0
  %718 = vmatprep.subr.mxu0 0.0
  %719 = vmatpush1.msra.mxu0 0.0
  %720 = vmatprep.subr.mxu0 0.0
  %721 = vmatpush1.msra.mxu0 0.0
  %722 = vmatprep.subr.mxu0 0.0
  %723 = vmatpush1.msra.mxu0 0.0
  %724 = vmatprep.subr.mxu0 0.0
  %725 = vmatpush1.msra.mxu0 0.0
  %726 = vmatprep.subr.mxu0 0.0
  %727 = vmatpush1.msra.mxu0 0.0
  %728 = vmatprep.subr.mxu0 0.0
  %729 = vmatpush1.msra.mxu0 0.0
  %730 = vmatprep.subr.mxu0 0.0
  %731 = vmatpush1.msra.mxu0 0.0
  %732 = vmatprep.subr.mxu0 0.0
  %733 = vmatpush1.msra.mxu0 0.0
  %734 = vmatprep.subr.mxu0 0.0
  %735 = vmatpush1.msra.mxu0 0.0
  %736 = vmatprep.subr.mxu0 0.0
  %737 = vmatpush1.msra.mxu0 0.0
  %738 = vmatprep.subr.mxu0 0.0
  %739 = vmatpush1.msra.mxu0 0.0
  %740 = vmatprep.subr.mxu0 0.0
  %741 = vmatpush1.msra.mxu0 0.0
  %742 = vmatprep.subr.mxu0 0.0
  %743 = vmatpush1.msra.mxu0 0.0
  %744 = vmatprep.subr.mxu0 0.0
  %745 = vmatpush1.msra.mxu0 0.0
  %746 = vmatprep.subr.mxu0 0.0
  %747 = vmatpush1.msra.mxu0 0.0
  %748 = vmatprep.subr.mxu0 0.0
  %749 = vmatpush1.msra.mxu0 0.0
  %750 = vmatprep.subr.mxu0 0.0
  %751 = vmatpush1.msra.mxu0 0.0
  %752 = vmatprep.subr.mxu0 0.0
  %753 = vmatpush1.msra.mxu0 0.0
  %754 = vmatprep.subr.mxu0 0.0
  %755 = vmatpush1.msra.mxu0 0.0
  %756 = vmatprep.mubr.f32.mxu0 0.0
  %757 = vmatmul.mubr.f32.gmra.mrb[0].mxu0 %v687
  %v758 = vpop.f32.mrb[0].mxu0
  %v759 = vadd.f32 %v684, %v758
  %v760 = vpop.f32.mrb[0].mxu0
  %761 = vmatprep.mubr.f32.mxu0 0.0
  %762 = vmatmul.mubr.f32.gmra.mrb[0].mxu0 %v690
  %v763 = vpop.f32.mrb[0].mxu0
  %v764 = vadd.f32 %v684, %v763
  %v765 = vpop.f32.mrb[0].mxu0
  %766 = vdwg.mxu0
  %771 = vrot.lane.b32.xlu0 %v28, 96
  %v772 = vpop.permute.xlu0 %771
  %773 = vrot.lane.b32.xlu0 %v31, 96
  %v774 = vpop.permute.xlu0 %773
  %775 = vrot.lane.b32.xlu0 %v34, 96
  %v776 = vpop.permute.xlu0 %775
  %777 = vrot.lane.b32.xlu0 %v37, 96
  %v778 = vpop.permute.xlu0 %777
  %783 = vrot.lane.b32.xlu0 %v384, 32
  %v784 = vpop.permute.xlu0 %783
  %v787 = vsel %vm565, %v759, 0
  %v790 = vsel %vm565, %v764, 0
  %792 = vmatprep.subr.mxu0 0.0
  %793 = vmatpush1.msra.mxu0 %v772
  %794 = vmatprep.subr.mxu0 0.0
  %795 = vmatpush1.msra.mxu0 %v774
  %796 = vmatprep.subr.mxu0 0.0
  %797 = vmatpush1.msra.mxu0 %v776
  %798 = vmatprep.subr.mxu0 0.0
  %799 = vmatpush1.msra.mxu0 %v778
  %800 = vmatprep.subr.mxu0 0.0
  %801 = vmatpush1.msra.mxu0 0.0
  %802 = vmatprep.subr.mxu0 0.0
  %803 = vmatpush1.msra.mxu0 0.0
  %804 = vmatprep.subr.mxu0 0.0
  %805 = vmatpush1.msra.mxu0 0.0
  %806 = vmatprep.subr.mxu0 0.0
  %807 = vmatpush1.msra.mxu0 0.0
  %808 = vmatprep.subr.mxu0 0.0
  %809 = vmatpush1.msra.mxu0 0.0
  %810 = vmatprep.subr.mxu0 0.0
  %811 = vmatpush1.msra.mxu0 0.0
  %812 = vmatprep.subr.mxu0 0.0
  %813 = vmatpush1.msra.mxu0 0.0
  %814 = vmatprep.subr.mxu0 0.0
  %815 = vmatpush1.msra.mxu0 0.0
  %816 = vmatprep.subr.mxu0 0.0
  %817 = vmatpush1.msra.mxu0 0.0
  %818 = vmatprep.subr.mxu0 0.0
  %819 = vmatpush1.msra.mxu0 0.0
  %820 = vmatprep.subr.mxu0 0.0
  %821 = vmatpush1.msra.mxu0 0.0
  %822 = vmatprep.subr.mxu0 0.0
  %823 = vmatpush1.msra.mxu0 0.0
  %824 = vmatprep.subr.mxu0 0.0
  %825 = vmatpush1.msra.mxu0 0.0
  %826 = vmatprep.subr.mxu0 0.0
  %827 = vmatpush1.msra.mxu0 0.0
  %828 = vmatprep.subr.mxu0 0.0
  %829 = vmatpush1.msra.mxu0 0.0
  %830 = vmatprep.subr.mxu0 0.0
  %831 = vmatpush1.msra.mxu0 0.0
  %832 = vmatprep.subr.mxu0 0.0
  %833 = vmatpush1.msra.mxu0 0.0
  %834 = vmatprep.subr.mxu0 0.0
  %835 = vmatpush1.msra.mxu0 0.0
  %836 = vmatprep.subr.mxu0 0.0
  %837 = vmatpush1.msra.mxu0 0.0
  %838 = vmatprep.subr.mxu0 0.0
  %839 = vmatpush1.msra.mxu0 0.0
  %840 = vmatprep.subr.mxu0 0.0
  %841 = vmatpush1.msra.mxu0 0.0
  %842 = vmatprep.subr.mxu0 0.0
  %843 = vmatpush1.msra.mxu0 0.0
  %844 = vmatprep.subr.mxu0 0.0
  %845 = vmatpush1.msra.mxu0 0.0
  %846 = vmatprep.subr.mxu0 0.0
  %847 = vmatpush1.msra.mxu0 0.0
  %848 = vmatprep.subr.mxu0 0.0
  %849 = vmatpush1.msra.mxu0 0.0
  %850 = vmatprep.subr.mxu0 0.0
  %851 = vmatpush1.msra.mxu0 0.0
  %852 = vmatprep.subr.mxu0 0.0
  %853 = vmatpush1.msra.mxu0 0.0
  %854 = vmatprep.subr.mxu0 0.0
  %855 = vmatpush1.msra.mxu0 0.0
  %856 = vmatprep.mubr.f32.mxu0 0.0
  %857 = vmatmul.mubr.f32.gmra.mrb[0].mxu0 %v787
  %v858 = vpop.f32.mrb[0].mxu0
  %v859 = vadd.f32 %v784, %v858
  %v860 = vpop.f32.mrb[0].mxu0
  %861 = vmatprep.mubr.f32.mxu0 0.0
  %862 = vmatmul.mubr.f32.gmra.mrb[0].mxu0 %v790
  %v863 = vpop.f32.mrb[0].mxu0
  %v864 = vadd.f32 %v784, %v863
  %v865 = vpop.f32.mrb[0].mxu0
  %866 = vdwg.mxu0
  %867 = vrot.lane.b32.xlu0 %v28, 32
  %v868 = vpop.permute.xlu0 %867
  %869 = vrot.lane.b32.xlu0 %v31, 32
  %v870 = vpop.permute.xlu0 %869
  %871 = vrot.lane.b32.xlu0 %v34, 32
  %v872 = vpop.permute.xlu0 %871
  %873 = vrot.lane.b32.xlu0 %v37, 32
  %v874 = vpop.permute.xlu0 %873
  %v880 = vsel %vm565, %v859, 0
  %v883 = vsel %vm565, %v864, 0
  %885 = vmatprep.subr.mxu0 0.0
  %886 = vmatpush1.msra.mxu0 %v868
  %887 = vmatprep.subr.mxu0 0.0
  %888 = vmatpush1.msra.mxu0 %v870
  %889 = vmatprep.subr.mxu0 0.0
  %890 = vmatpush1.msra.mxu0 %v872
  %891 = vmatprep.subr.mxu0 0.0
  %892 = vmatpush1.msra.mxu0 %v874
  %893 = vmatprep.subr.mxu0 0.0
  %894 = vmatpush1.msra.mxu0 0.0
  %895 = vmatprep.subr.mxu0 0.0
  %896 = vmatpush1.msra.mxu0 0.0
  %897 = vmatprep.subr.mxu0 0.0
  %898 = vmatpush1.msra.mxu0 0.0
  %899 = vmatprep.subr.mxu0 0.0
  %900 = vmatpush1.msra.mxu0 0.0
  %901 = vmatprep.subr.mxu0 0.0
  %902 = vmatpush1.msra.mxu0 0.0
  %903 = vmatprep.subr.mxu0 0.0
  %904 = vmatpush1.msra.mxu0 0.0
  %905 = vmatprep.subr.mxu0 0.0
  %906 = vmatpush1.msra.mxu0 0.0
  %907 = vmatprep.subr.mxu0 0.0
  %908 = vmatpush1.msra.mxu0 0.0
  %909 = vmatprep.subr.mxu0 0.0
  %910 = vmatpush1.msra.mxu0 0.0
  %911 = vmatprep.subr.mxu0 0.0
  %912 = vmatpush1.msra.mxu0 0.0
  %913 = vmatprep.subr.mxu0 0.0
  %914 = vmatpush1.msra.mxu0 0.0
  %915 = vmatprep.subr.mxu0 0.0
  %916 = vmatpush1.msra.mxu0 0.0
  %917 = vmatprep.subr.mxu0 0.0
  %918 = vmatpush1.msra.mxu0 0.0
  %919 = vmatprep.subr.mxu0 0.0
  %920 = vmatpush1.msra.mxu0 0.0
  %921 = vmatprep.subr.mxu0 0.0
  %922 = vmatpush1.msra.mxu0 0.0
  %923 = vmatprep.subr.mxu0 0.0
  %924 = vmatpush1.msra.mxu0 0.0
  %925 = vmatprep.subr.mxu0 0.0
  %926 = vmatpush1.msra.mxu0 0.0
  %927 = vmatprep.subr.mxu0 0.0
  %928 = vmatpush1.msra.mxu0 0.0
  %929 = vmatprep.subr.mxu0 0.0
  %930 = vmatpush1.msra.mxu0 0.0
  %931 = vmatprep.subr.mxu0 0.0
  %932 = vmatpush1.msra.mxu0 0.0
  %933 = vmatprep.subr.mxu0 0.0
  %934 = vmatpush1.msra.mxu0 0.0
  %935 = vmatprep.subr.mxu0 0.0
  %936 = vmatpush1.msra.mxu0 0.0
  %937 = vmatprep.subr.mxu0 0.0
  %938 = vmatpush1.msra.mxu0 0.0
  %939 = vmatprep.subr.mxu0 0.0
  %940 = vmatpush1.msra.mxu0 0.0
  %941 = vmatprep.subr.mxu0 0.0
  %942 = vmatpush1.msra.mxu0 0.0
  %943 = vmatprep.subr.mxu0 0.0
  %944 = vmatpush1.msra.mxu0 0.0
  %945 = vmatprep.subr.mxu0 0.0
  %946 = vmatpush1.msra.mxu0 0.0
  %947 = vmatprep.subr.mxu0 0.0
  %948 = vmatpush1.msra.mxu0 0.0
  %949 = vmatprep.mubr.f32.mxu0 0.0
  %950 = vmatmul.mubr.f32.gmra.mrb[0].mxu0 %v880
  %v951 = vpop.f32.mrb[0].mxu0
  %v952 = vadd.f32 0.0, %v951
  %v953 = vpop.f32.mrb[0].mxu0
  %954 = vmatprep.mubr.f32.mxu0 0.0
  %955 = vmatmul.mubr.f32.gmra.mrb[0].mxu0 %v883
  %v956 = vpop.f32.mrb[0].mxu0
  %v957 = vadd.f32 0.0, %v956
  %v958 = vpop.f32.mrb[0].mxu0
  %959 = vdwg.mxu0
  %962 = vrot.lane.b32.xlu0 %v681, 32
  %v963 = vpop.permute.xlu0 %962
  %964 = vrot.lane.b32.xlu0 %v682, 32
  %v965 = vpop.permute.xlu0 %964
  %966 = vrot.lane.b32.xlu0 %v28, 64
  %v967 = vpop.permute.xlu0 %966
  %968 = vrot.lane.b32.xlu0 %v31, 64
  %v969 = vpop.permute.xlu0 %968
  %970 = vrot.lane.b32.xlu0 %v34, 64
  %v971 = vpop.permute.xlu0 %970
  %972 = vrot.lane.b32.xlu0 %v37, 64
  %v973 = vpop.permute.xlu0 %972
  %v978 = vsel %vm565, %v963, 0
  %v980 = vsel %vm565, %v965, 0
  %982 = vmatprep.subr.mxu0 0.0
  %983 = vmatpush1.msra.mxu0 %v967
  %984 = vmatprep.subr.mxu0 0.0
  %985 = vmatpush1.msra.mxu0 %v969
  %986 = vmatprep.subr.mxu0 0.0
  %987 = vmatpush1.msra.mxu0 %v971
  %988 = vmatprep.subr.mxu0 0.0
  %989 = vmatpush1.msra.mxu0 %v973
  %990 = vmatprep.subr.mxu0 0.0
  %991 = vmatpush1.msra.mxu0 0.0
  %992 = vmatprep.subr.mxu0 0.0
  %993 = vmatpush1.msra.mxu0 0.0
  %994 = vmatprep.subr.mxu0 0.0
  %995 = vmatpush1.msra.mxu0 0.0
  %996 = vmatprep.subr.mxu0 0.0
  %997 = vmatpush1.msra.mxu0 0.0
  %998 = vmatprep.subr.mxu0 0.0
  %999 = vmatpush1.msra.mxu0 0.0
  %1000 = vmatprep.subr.mxu0 0.0
  %1001 = vmatpush1.msra.mxu0 0.0
  %1002 = vmatprep.subr.mxu0 0.0
  %1003 = vmatpush1.msra.mxu0 0.0
  %1004 = vmatprep.subr.mxu0 0.0
  %1005 = vmatpush1.msra.mxu0 0.0
  %1006 = vmatprep.subr.mxu0 0.0
  %1007 = vmatpush1.msra.mxu0 0.0
  %1008 = vmatprep.subr.mxu0 0.0
  %1009 = vmatpush1.msra.mxu0 0.0
  %1010 = vmatprep.subr.mxu0 0.0
  %1011 = vmatpush1.msra.mxu0 0.0
  %1012 = vmatprep.subr.mxu0 0.0
  %1013 = vmatpush1.msra.mxu0 0.0
  %1014 = vmatprep.subr.mxu0 0.0
  %1015 = vmatpush1.msra.mxu0 0.0
  %1016 = vmatprep.subr.mxu0 0.0
  %1017 = vmatpush1.msra.mxu0 0.0
  %1018 = vmatprep.subr.mxu0 0.0
  %1019 = vmatpush1.msra.mxu0 0.0
  %1020 = vmatprep.subr.mxu0 0.0
  %1021 = vmatpush1.msra.mxu0 0.0
  %1022 = vmatprep.subr.mxu0 0.0
  %1023 = vmatpush1.msra.mxu0 0.0
  %1024 = vmatprep.subr.mxu0 0.0
  %1025 = vmatpush1.msra.mxu0 0.0
  %1026 = vmatprep.subr.mxu0 0.0
  %1027 = vmatpush1.msra.mxu0 0.0
  %1028 = vmatprep.subr.mxu0 0.0
  %1029 = vmatpush1.msra.mxu0 0.0
  %1030 = vmatprep.subr.mxu0 0.0
  %1031 = vmatpush1.msra.mxu0 0.0
  %1032 = vmatprep.subr.mxu0 0.0
  %1033 = vmatpush1.msra.mxu0 0.0
  %1034 = vmatprep.subr.mxu0 0.0
  %1035 = vmatpush1.msra.mxu0 0.0
  %1036 = vmatprep.subr.mxu0 0.0
  %1037 = vmatpush1.msra.mxu0 0.0
  %1038 = vmatprep.subr.mxu0 0.0
  %1039 = vmatpush1.msra.mxu0 0.0
  %1040 = vmatprep.subr.mxu0 0.0
  %1041 = vmatpush1.msra.mxu0 0.0
  %1042 = vmatprep.subr.mxu0 0.0
  %1043 = vmatpush1.msra.mxu0 0.0
  %1044 = vmatprep.subr.mxu0 0.0
  %1045 = vmatpush1.msra.mxu0 0.0
  %1046 = vmatprep.mubr.f32.mxu0 0.0
  %1047 = vmatmul.mubr.f32.gmra.mrb[0].mxu0 %v978
  %v1048 = vpop.f32.mrb[0].mxu0
  %v1049 = vadd.f32 %v952, %v1048
  %v1050 = vpop.f32.mrb[0].mxu0
  %1051 = vmatprep.mubr.f32.mxu0 0.0
  %1052 = vmatmul.mubr.f32.gmra.mrb[0].mxu0 %v980
  %v1053 = vpop.f32.mrb[0].mxu0
  %v1054 = vadd.f32 %v957, %v1053
  %v1055 = vpop.f32.mrb[0].mxu0
  %1056 = vdwg.mxu0
  %v1057 = vlaneseq
  %v1058 = vshrl.u32 %v1057, 7
  %v1059 = vsub.s32 2, %v1058
  %v1060 = vrot.slane %v39, %v1059
  %v1061 = vadd.f32 %v1049, %v1060
  %v1062 = vadd.f32 %v1054, %v1060
  %v1063 = vmax.f32 %v1061, 0.0
  %v1064 = vmax.f32 %v1062, 0.0
  %1066 = vrot.lane.b32.xlu0 %v1060, 96
  %v1067 = vpop.permute.xlu0 %1066
  %v1070 = vsel %vm565, %v1063, 0
  %v1073 = vsel %vm565, %v1064, 0
  %1075 = vmatprep.subr.mxu0 0.0
  %1076 = vmatpush1.msra.mxu0 %v29
  %1077 = vmatprep.subr.mxu0 0.0
  %1078 = vmatpush1.msra.mxu0 %v32
  %1079 = vmatprep.subr.mxu0 0.0
  %1080 = vmatpush1.msra.mxu0 %v35
  %1081 = vmatprep.subr.mxu0 0.0
  %1082 = vmatpush1.msra.mxu0 %v38
  %1083 = vmatprep.subr.mxu0 0.0
  %1084 = vmatpush1.msra.mxu0 0.0
  %1085 = vmatprep.subr.mxu0 0.0
  %1086 = vmatpush1.msra.mxu0 0.0
  %1087 = vmatprep.subr.mxu0 0.0
  %1088 = vmatpush1.msra.mxu0 0.0
  %1089 = vmatprep.subr.mxu0 0.0
  %1090 = vmatpush1.msra.mxu0 0.0
  %1091 = vmatprep.subr.mxu0 0.0
  %1092 = vmatpush1.msra.mxu0 0.0
  %1093 = vmatprep.subr.mxu0 0.0
  %1094 = vmatpush1.msra.mxu0 0.0
  %1095 = vmatprep.subr.mxu0 0.0
  %1096 = vmatpush1.msra.mxu0 0.0
  %1097 = vmatprep.subr.mxu0 0.0
  %1098 = vmatpush1.msra.mxu0 0.0
  %1099 = vmatprep.subr.mxu0 0.0
  %1100 = vmatpush1.msra.mxu0 0.0
  %1101 = vmatprep.subr.mxu0 0.0
  %1102 = vmatpush1.msra.mxu0 0.0
  %1103 = vmatprep.subr.mxu0 0.0
  %1104 = vmatpush1.msra.mxu0 0.0
  %1105 = vmatprep.subr.mxu0 0.0
  %1106 = vmatpush1.msra.mxu0 0.0
  %1107 = vmatprep.subr.mxu0 0.0
  %1108 = vmatpush1.msra.mxu0 0.0
  %1109 = vmatprep.subr.mxu0 0.0
  %1110 = vmatpush1.msra.mxu0 0.0
  %1111 = vmatprep.subr.mxu0 0.0
  %1112 = vmatpush1.msra.mxu0 0.0
  %1113 = vmatprep.subr.mxu0 0.0
  %1114 = vmatpush1.msra.mxu0 0.0
  %1115 = vmatprep.subr.mxu0 0.0
  %1116 = vmatpush1.msra.mxu0 0.0
  %1117 = vmatprep.subr.mxu0 0.0
  %1118 = vmatpush1.msra.mxu0 0.0
  %1119 = vmatprep.subr.mxu0 0.0
  %1120 = vmatpush1.msra.mxu0 0.0
  %1121 = vmatprep.subr.mxu0 0.0
  %1122 = vmatpush1.msra.mxu0 0.0
  %1123 = vmatprep.subr.mxu0 0.0
  %1124 = vmatpush1.msra.mxu0 0.0
  %1125 = vmatprep.subr.mxu0 0.0
  %1126 = vmatpush1.msra.mxu0 0.0
  %1127 = vmatprep.subr.mxu0 0.0
  %1128 = vmatpush1.msra.mxu0 0.0
  %1129 = vmatprep.subr.mxu0 0.0
  %1130 = vmatpush1.msra.mxu0 0.0
  %1131 = vmatprep.subr.mxu0 0.0
  %1132 = vmatpush1.msra.mxu0 0.0
  %1133 = vmatprep.subr.mxu0 0.0
  %1134 = vmatpush1.msra.mxu0 0.0
  %1135 = vmatprep.subr.mxu0 0.0
  %1136 = vmatpush1.msra.mxu0 0.0
  %1137 = vmatprep.subr.mxu0 0.0
  %1138 = vmatpush1.msra.mxu0 0.0
  %1139 = vmatprep.mubr.f32.mxu0 0.0
  %1140 = vmatmul.mubr.f32.gmra.mrb[0].mxu0 %v1070
  %v1141 = vpop.f32.mrb[0].mxu0
  %v1142 = vadd.f32 %v1067, %v1141
  %v1143 = vpop.f32.mrb[0].mxu0
  %1144 = vmatprep.mubr.f32.mxu0 0.0
  %1145 = vmatmul.mubr.f32.gmra.mrb[0].mxu0 %v1073
  %v1146 = vpop.f32.mrb[0].mxu0
  %v1147 = vadd.f32 %v1067, %v1146
  %v1148 = vpop.f32.mrb[0].mxu0
  %1149 = vdwg.mxu0
  %1150 = vrot.lane.b32.xlu0 %v681, 48
  %v1151 = vpop.permute.xlu0 %1150
  %1152 = vrot.lane.b32.xlu0 %v682, 48
  %v1153 = vpop.permute.xlu0 %1152
  %1156 = vrot.lane.b32.xlu0 %v859, 48
  %v1157 = vpop.permute.xlu0 %1156
  %1158 = vrot.lane.b32.xlu0 %v864, 48
  %v1159 = vpop.permute.xlu0 %1158
  %v1162 = vsel %vm42, %v1142, %v1151
  %v1163 = vsel %vm42, %v1147, %v1153
  %vm1164 = vcmask 392192
  %v1165 = vsel %vm1164, %v1162, %v1157
  %v1166 = vsel %vm1164, %v1163, %v1159
  %vm1167 = vcmask 654336
  %v1168 = vsel %vm1167, %v1165, 0.0
  %v1169 = vsel %vm1167, %v1166, 0.0
  %1170 = vst [vmem:[%s6] sm:$0xff] %v1168
  %1171 = vst [vmem:[%s6 + $0x8] sm:$0xff] %v1169
  // Predicated region
  $region26: #{forward.1} parent=0 // pred_check
    _
  $region27: #{forward.1} parent=0 // pred_check_branch
    %1173 = sbr.rel (0) target = $region29
  $region28: #{forward.1} parent=0 // pred_region
    _
  $region29: #{forward.1} parent=0 // pred_fallthru
    _
  // Predicated region
  $region30: #{forward.1} parent=0 // pred_check
    _
  $region31: #{forward.1} parent=0 // pred_check_branch
    %1175 = sbr.rel (0) target = $region33
  $region32: #{forward.1} parent=0 // pred_region
    _
  $region33: #{forward.1} parent=0 // pred_fallthru
    _

</llo_original>
